<compile_context>
chip_gen: v6e
topology: v6e:2x2x1
jax: 0.10.0
libtpu: 0.0.40
codegen_flags: <defaults>
</compile_context>

<pallas_src>
import jax
import jax.numpy as jnp
from jax.experimental import pallas as pl
from jax.experimental.pallas import tpu as pltpu

# ----------------------------- problem sizes ---------------------------------
B = 2          # batch
C_IN = 4       # n_inputs
C_OUT = 8      # n_outputs
L = 16         # sequence length
K = 3          # kernel_size
DIL = 1        # dilation
PAD = 2        # padding (circular, both sides)
STRIDE = 1

L1 = L + 2 * PAD - DIL * (K - 1)     # length after conv1                 = 18
L2 = L1 + 2 * PAD - DIL * (K - 1)    # length after conv2                 = 20
IDX = (L2 - L) // 2                  # center-crop offset used in forward = 2
LANES = 128                          # lane-dense output width

# The in-kernel reduction to two period-L circular convolutions is valid iff:
assert STRIDE == 1
assert L <= L1 <= 2 * L                                   # h1[t] == h1[t mod L]
assert 0 <= IDX - PAD and (L - 1) + IDX + (K - 1) * DIL - PAD < L1
# (post-crop conv2 taps never wrap around the length-L1 circular pad)

# packed-parameter column layout: [W1 taps | W2 taps | Wd | b1 | b2 | bd]
OFF_W1 = 0
OFF_W2 = OFF_W1 + K * C_IN
OFF_WD = OFF_W2 + K * C_OUT
OFF_B1 = OFF_WD + C_IN
OFF_B2 = OFF_B1 + 1
OFF_BD = OFF_B2 + 1
P_COLS = OFF_BD + 1                  # 43


# ------------------------------- Pallas kernel --------------------------------
def _seg_roll_left(a, j):
    """Circularly roll each length-L batch segment of the lane axis left by j.

    a: (C, B*L).  Static slices + lane concat inside a single vreg; segments
    are 16-lane aligned so this is a handful of lane selects (no sublane moves).
    """
    j = j % L
    if j == 0:
        return a
    parts = []
    for b in range(B):
        seg = a[:, b * L:(b + 1) * L]
        parts.append(seg[:, j:])
        parts.append(seg[:, :j])
    return jnp.concatenate(parts, axis=-1)


def temporal_block_kernel(x_ref, p_ref, o_ref):
    # x_ref : (C_IN, B*L)     batch packed along lanes
    # p_ref : (C_OUT, P_COLS) packed parameters (column layout above)
    # o_ref : (C_OUT, LANES)  lane-dense output; columns [0, B*L) are valid
    x = x_ref[...]
    p = p_ref[...]
    b1 = p[:, OFF_B1:OFF_B1 + 1]
    b2 = p[:, OFF_B2:OFF_B2 + 1]
    bd = p[:, OFF_BD:OFF_BD + 1]

    # ---- conv1 + bias + relu: K shifted-accumulate matmuls (period-L circular)
    #   c1[:, t] = relu(b1 + sum_k W1[:,:,k] @ x[:, (t + k*DIL - PAD) mod L])
    acc = jnp.dot(p[:, OFF_W1:OFF_W1 + C_IN],
                  _seg_roll_left(x, 0 * DIL - PAD),
                  preferred_element_type=jnp.float32)
    for k in range(1, K):
        w1k = p[:, OFF_W1 + k * C_IN:OFF_W1 + (k + 1) * C_IN]
        acc += jnp.dot(w1k, _seg_roll_left(x, k * DIL - PAD),
                       preferred_element_type=jnp.float32)
    c1 = jnp.maximum(acc + b1, 0.0)                       # (C_OUT, B*L)
    # dropout1: identity at inference

    # ---- conv2 + bias + relu, fused with the center crop (shift IDX+k*DIL-PAD)
    #   out[:, t] = relu(b2 + sum_k W2[:,:,k] @ c1[:, (t + IDX + k*DIL - PAD) mod L])
    acc = jnp.dot(p[:, OFF_W2:OFF_W2 + C_OUT],
                  _seg_roll_left(c1, IDX + 0 * DIL - PAD),
                  preferred_element_type=jnp.float32)
    for k in range(1, K):
        w2k = p[:, OFF_W2 + k * C_OUT:OFF_W2 + (k + 1) * C_OUT]
        acc += jnp.dot(w2k, _seg_roll_left(c1, IDX + k * DIL - PAD),
                       preferred_element_type=jnp.float32)
    out = jnp.maximum(acc + b2, 0.0)                      # (C_OUT, B*L)
    # dropout2: identity at inference

    # ---- residual 1x1 conv (pointwise, batch packing irrelevant) ----
    res = jnp.dot(p[:, OFF_WD:OFF_WD + C_IN], x,
                  preferred_element_type=jnp.float32) + bd

    y = jnp.maximum(out + res, 0.0)                       # (C_OUT, B*L)
    # lane-dense (C_OUT, 128) store: pad with zeros -> one unmasked vst
    o_ref[...] = jnp.concatenate(
        [y, jnp.zeros((C_OUT, LANES - B * L), y.dtype)], axis=-1
    ).astype(o_ref.dtype)


def _pack_params(w1, b1, w2, b2, wd, bd):
    cols = ([w1[:, :, k] for k in range(K)]
            + [w2[:, :, k] for k in range(K)]
            + [wd, b1, b2, bd])
    return jnp.concatenate(cols, axis=1)                  # (C_OUT, P_COLS)


@jax.jit
def temporal_block(x, w1, b1, w2, b2, wd, bd):
    """x: (B, C_IN, L) float32 -> (B, C_OUT, L) float32."""
    x_packed = jnp.transpose(x, (1, 0, 2)).reshape(C_IN, B * L)
    params = _pack_params(w1, b1, w2, b2, wd, bd)

    full = lambda shape: pl.BlockSpec(shape, lambda i: (0,) * len(shape))
    y_pad = pl.pallas_call(
        temporal_block_kernel,
        out_shape=jax.ShapeDtypeStruct((C_OUT, LANES), jnp.float32),
        grid=(1,),                                        # single grid step
        in_specs=[
            full((C_IN, B * L)),      # x, batch lane-packed
            full((C_OUT, P_COLS)),    # packed weights + biases
        ],
        out_specs=full((C_OUT, LANES)),
        compiler_params=pltpu.CompilerParams(
            dimension_semantics=("arbitrary",)),
    )(x_packed, params)

    y = y_pad[:, :B * L]                                  # drop lane padding
    return jnp.transpose(y.reshape(C_OUT, B, L), (1, 0, 2))


# --------------------------- parameter construction ---------------------------
def weight_norm_effective(v, g):
    # PyTorch weight_norm default dim=0: per-output-channel norm over (in, k).
    norm = jnp.sqrt(jnp.sum(v * v, axis=(1, 2), keepdims=True))
    return (g[:, None, None] * v / norm).astype(jnp.float32)


def make_params(key):
    ks = jax.random.split(key, 8)
    v1 = 0.01 * jax.random.normal(ks[0], (C_OUT, C_IN, K), jnp.float32)
    g1 = 1.0 + 0.1 * jax.random.normal(ks[1], (C_OUT,), jnp.float32)
    b1 = 0.05 * jax.random.normal(ks[2], (C_OUT, 1), jnp.float32)
    v2 = 0.01 * jax.random.normal(ks[3], (C_OUT, C_OUT, K), jnp.float32)
    g2 = 1.0 + 0.1 * jax.random.normal(ks[4], (C_OUT,), jnp.float32)
    b2 = 0.05 * jax.random.normal(ks[5], (C_OUT, 1), jnp.float32)
    wd = 0.01 * jax.random.normal(ks[6], (C_OUT, C_IN), jnp.float32)
    bd = 0.05 * jax.random.normal(ks[7], (C_OUT, 1), jnp.float32)
    w1 = weight_norm_effective(v1, g1)
    w2 = weight_norm_effective(v2, g2)
    return w1, b1, w2, b2, wd, bd


# ------------------------------ pure-JAX reference -----------------------------
def conv1d_circular_ref(x, w, b, pad, dil):
    xp = jnp.concatenate([x[..., -pad:], x, x[..., :pad]], axis=-1)
    y = jax.lax.conv_general_dilated(
        xp, w, window_strides=(1,), padding="VALID", rhs_dilation=(dil,),
        dimension_numbers=("NCH", "OIH", "NCH"))
    return y + b.reshape(1, -1, 1)


def temporal_block_ref(x, w1, b1, w2, b2, wd, bd):
    h1 = jax.nn.relu(conv1d_circular_ref(x, w1, b1, PAD, DIL))
    h2 = jax.nn.relu(conv1d_circular_ref(h1, w2, b2, PAD, DIL))
    out = h2[:, :, IDX:IDX + L]
    res = jnp.einsum("oi,bil->bol", wd, x) + bd.reshape(1, -1, 1)
    return jax.nn.relu(out + res)


# ------------------------------------ main -------------------------------------
if __name__ == "__main__":
    key = jax.random.PRNGKey(0)
    kx, kp = jax.random.split(key)
    x = jax.random.normal(kx, (B, C_IN, L), jnp.float32)
    params = make_params(kp)

    y = temporal_block(x, *params)
    jax.block_until_ready(y)

    y_ref = temporal_block_ref(x, *params)
    assert y.shape == (B, C_OUT, L)
    assert jnp.allclose(y, y_ref, rtol=1e-5, atol=1e-5), "mismatch vs reference"

    print("KERNEL_OK")
</pallas_src>

<mosaic_0001>
module attributes {stable_mosaic.version = 11 : i64} {
  func.func @temporal_block_kernel(%arg0: i32, %arg1: memref<4x32xf32, #tpu.memory_space<vmem>>, %arg2: memref<8x43xf32, #tpu.memory_space<vmem>>, %arg3: memref<8x128xf32, #tpu.memory_space<vmem>>) attributes {dimension_semantics = [#tpu.dimension_semantics<arbitrary>], iteration_bounds = array<i64: 1>, scalar_prefetch = 0 : i64, scratch_operands = 0 : i64, tpu.core_type = #tpu.core_type<tc>, window_params = [{pipeline_mode = #tpu.pipeline_mode<synchronous>, transform_indices = @transform_0, window_bounds = array<i64: 4, 32>}, {pipeline_mode = #tpu.pipeline_mode<synchronous>, transform_indices = @transform_1, window_bounds = array<i64: 8, 43>}, {pipeline_mode = #tpu.pipeline_mode<synchronous>, transform_indices = @transform_2, window_bounds = array<i64: 8, 128>}]} {
    %c0 = arith.constant 0 : index
    %c0_0 = arith.constant 0 : index
    %0 = vector.load %arg1[%c0, %c0_0] : memref<4x32xf32, #tpu.memory_space<vmem>>, vector<4x32xf32>
    %c0_1 = arith.constant 0 : index
    %c0_2 = arith.constant 0 : index
    %1 = vector.load %arg2[%c0_1, %c0_2] : memref<8x43xf32, #tpu.memory_space<vmem>>, vector<8x43xf32>
    %2 = vector.extract_strided_slice %1 {offsets = [0, 40], sizes = [8, 1], strides = [1, 1]} : vector<8x43xf32> to vector<8x1xf32>
    %3 = vector.extract_strided_slice %1 {offsets = [0, 41], sizes = [8, 1], strides = [1, 1]} : vector<8x43xf32> to vector<8x1xf32>
    %4 = vector.extract_strided_slice %1 {offsets = [0, 42], sizes = [8, 1], strides = [1, 1]} : vector<8x43xf32> to vector<8x1xf32>
    %5 = vector.extract_strided_slice %1 {offsets = [0, 0], sizes = [8, 4], strides = [1, 1]} : vector<8x43xf32> to vector<8x4xf32>
    %6 = vector.extract_strided_slice %0 {offsets = [0, 0], sizes = [4, 16], strides = [1, 1]} : vector<4x32xf32> to vector<4x16xf32>
    %7 = vector.extract_strided_slice %6 {offsets = [0, 14], sizes = [4, 2], strides = [1, 1]} : vector<4x16xf32> to vector<4x2xf32>
    %8 = vector.extract_strided_slice %6 {offsets = [0, 0], sizes = [4, 14], strides = [1, 1]} : vector<4x16xf32> to vector<4x14xf32>
    %9 = vector.extract_strided_slice %0 {offsets = [0, 16], sizes = [4, 16], strides = [1, 1]} : vector<4x32xf32> to vector<4x16xf32>
    %10 = vector.extract_strided_slice %9 {offsets = [0, 14], sizes = [4, 2], strides = [1, 1]} : vector<4x16xf32> to vector<4x2xf32>
    %11 = vector.extract_strided_slice %9 {offsets = [0, 0], sizes = [4, 14], strides = [1, 1]} : vector<4x16xf32> to vector<4x14xf32>
    %12 = tpu.concatenate %7, %8, %10, %11 in 1 : vector<4x2xf32>, vector<4x14xf32>, vector<4x2xf32>, vector<4x14xf32> -> vector<4x32xf32>
    %cst = arith.constant dense<0.000000e+00> : vector<8x32xf32>
    %13 = tpu.matmul %5, %12, %cst {dimension_numbers = #tpu.dot_dimension_numbers<[1], [0], [0], [1], [0, 0, 1, 1], [], []>} : vector<8x4xf32>, vector<4x32xf32>, vector<8x32xf32> -> vector<8x32xf32>
    %14 = vector.extract_strided_slice %1 {offsets = [0, 4], sizes = [8, 4], strides = [1, 1]} : vector<8x43xf32> to vector<8x4xf32>
    %15 = vector.extract_strided_slice %0 {offsets = [0, 0], sizes = [4, 16], strides = [1, 1]} : vector<4x32xf32> to vector<4x16xf32>
    %16 = vector.extract_strided_slice %15 {offsets = [0, 15], sizes = [4, 1], strides = [1, 1]} : vector<4x16xf32> to vector<4x1xf32>
    %17 = vector.extract_strided_slice %15 {offsets = [0, 0], sizes = [4, 15], strides = [1, 1]} : vector<4x16xf32> to vector<4x15xf32>
    %18 = vector.extract_strided_slice %0 {offsets = [0, 16], sizes = [4, 16], strides = [1, 1]} : vector<4x32xf32> to vector<4x16xf32>
    %19 = vector.extract_strided_slice %18 {offsets = [0, 15], sizes = [4, 1], strides = [1, 1]} : vector<4x16xf32> to vector<4x1xf32>
    %20 = vector.extract_strided_slice %18 {offsets = [0, 0], sizes = [4, 15], strides = [1, 1]} : vector<4x16xf32> to vector<4x15xf32>
    %21 = tpu.concatenate %16, %17, %19, %20 in 1 : vector<4x1xf32>, vector<4x15xf32>, vector<4x1xf32>, vector<4x15xf32> -> vector<4x32xf32>
    %cst_3 = arith.constant dense<0.000000e+00> : vector<8x32xf32>
    %22 = tpu.matmul %14, %21, %cst_3 {dimension_numbers = #tpu.dot_dimension_numbers<[1], [0], [0], [1], [0, 0, 1, 1], [], []>} : vector<8x4xf32>, vector<4x32xf32>, vector<8x32xf32> -> vector<8x32xf32>
    %23 = arith.addf %13, %22 : vector<8x32xf32>
    %24 = vector.extract_strided_slice %1 {offsets = [0, 8], sizes = [8, 4], strides = [1, 1]} : vector<8x43xf32> to vector<8x4xf32>
    %cst_4 = arith.constant dense<0.000000e+00> : vector<8x32xf32>
    %25 = tpu.matmul %24, %0, %cst_4 {dimension_numbers = #tpu.dot_dimension_numbers<[1], [0], [0], [1], [0, 0, 1, 1], [], []>} : vector<8x4xf32>, vector<4x32xf32>, vector<8x32xf32> -> vector<8x32xf32>
    %26 = arith.addf %23, %25 : vector<8x32xf32>
    %27 = vector.broadcast %2 : vector<8x1xf32> to vector<8x32xf32>
    %28 = arith.addf %26, %27 : vector<8x32xf32>
    %cst_5 = arith.constant 0.000000e+00 : f32
    %29 = vector.broadcast %cst_5 : f32 to vector<8x32xf32>
    %30 = arith.maximumf %28, %29 : vector<8x32xf32>
    %31 = vector.extract_strided_slice %1 {offsets = [0, 12], sizes = [8, 8], strides = [1, 1]} : vector<8x43xf32> to vector<8x8xf32>
    %cst_6 = arith.constant dense<0.000000e+00> : vector<8x32xf32>
    %32 = tpu.matmul %31, %30, %cst_6 {dimension_numbers = #tpu.dot_dimension_numbers<[1], [0], [0], [1], [0, 0, 1, 1], [], []>} : vector<8x8xf32>, vector<8x32xf32>, vector<8x32xf32> -> vector<8x32xf32>
    %33 = vector.extract_strided_slice %1 {offsets = [0, 20], sizes = [8, 8], strides = [1, 1]} : vector<8x43xf32> to vector<8x8xf32>
    %34 = vector.extract_strided_slice %30 {offsets = [0, 0], sizes = [8, 16], strides = [1, 1]} : vector<8x32xf32> to vector<8x16xf32>
    %35 = vector.extract_strided_slice %34 {offsets = [0, 1], sizes = [8, 15], strides = [1, 1]} : vector<8x16xf32> to vector<8x15xf32>
    %36 = vector.extract_strided_slice %34 {offsets = [0, 0], sizes = [8, 1], strides = [1, 1]} : vector<8x16xf32> to vector<8x1xf32>
    %37 = vector.extract_strided_slice %30 {offsets = [0, 16], sizes = [8, 16], strides = [1, 1]} : vector<8x32xf32> to vector<8x16xf32>
    %38 = vector.extract_strided_slice %37 {offsets = [0, 1], sizes = [8, 15], strides = [1, 1]} : vector<8x16xf32> to vector<8x15xf32>
    %39 = vector.extract_strided_slice %37 {offsets = [0, 0], sizes = [8, 1], strides = [1, 1]} : vector<8x16xf32> to vector<8x1xf32>
    %40 = tpu.concatenate %35, %36, %38, %39 in 1 : vector<8x15xf32>, vector<8x1xf32>, vector<8x15xf32>, vector<8x1xf32> -> vector<8x32xf32>
    %cst_7 = arith.constant dense<0.000000e+00> : vector<8x32xf32>
    %41 = tpu.matmul %33, %40, %cst_7 {dimension_numbers = #tpu.dot_dimension_numbers<[1], [0], [0], [1], [0, 0, 1, 1], [], []>} : vector<8x8xf32>, vector<8x32xf32>, vector<8x32xf32> -> vector<8x32xf32>
    %42 = arith.addf %32, %41 : vector<8x32xf32>
    %43 = vector.extract_strided_slice %1 {offsets = [0, 28], sizes = [8, 8], strides = [1, 1]} : vector<8x43xf32> to vector<8x8xf32>
    %44 = vector.extract_strided_slice %30 {offsets = [0, 0], sizes = [8, 16], strides = [1, 1]} : vector<8x32xf32> to vector<8x16xf32>
    %45 = vector.extract_strided_slice %44 {offsets = [0, 2], sizes = [8, 14], strides = [1, 1]} : vector<8x16xf32> to vector<8x14xf32>
    %46 = vector.extract_strided_slice %44 {offsets = [0, 0], sizes = [8, 2], strides = [1, 1]} : vector<8x16xf32> to vector<8x2xf32>
    %47 = vector.extract_strided_slice %30 {offsets = [0, 16], sizes = [8, 16], strides = [1, 1]} : vector<8x32xf32> to vector<8x16xf32>
    %48 = vector.extract_strided_slice %47 {offsets = [0, 2], sizes = [8, 14], strides = [1, 1]} : vector<8x16xf32> to vector<8x14xf32>
    %49 = vector.extract_strided_slice %47 {offsets = [0, 0], sizes = [8, 2], strides = [1, 1]} : vector<8x16xf32> to vector<8x2xf32>
    %50 = tpu.concatenate %45, %46, %48, %49 in 1 : vector<8x14xf32>, vector<8x2xf32>, vector<8x14xf32>, vector<8x2xf32> -> vector<8x32xf32>
    %cst_8 = arith.constant dense<0.000000e+00> : vector<8x32xf32>
    %51 = tpu.matmul %43, %50, %cst_8 {dimension_numbers = #tpu.dot_dimension_numbers<[1], [0], [0], [1], [0, 0, 1, 1], [], []>} : vector<8x8xf32>, vector<8x32xf32>, vector<8x32xf32> -> vector<8x32xf32>
    %52 = arith.addf %42, %51 : vector<8x32xf32>
    %53 = vector.broadcast %3 : vector<8x1xf32> to vector<8x32xf32>
    %54 = arith.addf %52, %53 : vector<8x32xf32>
    %cst_9 = arith.constant 0.000000e+00 : f32
    %55 = vector.broadcast %cst_9 : f32 to vector<8x32xf32>
    %56 = arith.maximumf %54, %55 : vector<8x32xf32>
    %57 = vector.extract_strided_slice %1 {offsets = [0, 36], sizes = [8, 4], strides = [1, 1]} : vector<8x43xf32> to vector<8x4xf32>
    %cst_10 = arith.constant dense<0.000000e+00> : vector<8x32xf32>
    %58 = tpu.matmul %57, %0, %cst_10 {dimension_numbers = #tpu.dot_dimension_numbers<[1], [0], [0], [1], [0, 0, 1, 1], [], []>} : vector<8x4xf32>, vector<4x32xf32>, vector<8x32xf32> -> vector<8x32xf32>
    %59 = vector.broadcast %4 : vector<8x1xf32> to vector<8x32xf32>
    %60 = arith.addf %58, %59 : vector<8x32xf32>
    %61 = arith.addf %56, %60 : vector<8x32xf32>
    %cst_11 = arith.constant 0.000000e+00 : f32
    %62 = vector.broadcast %cst_11 : f32 to vector<8x32xf32>
    %63 = arith.maximumf %61, %62 : vector<8x32xf32>
    %cst_12 = arith.constant 0.000000e+00 : f32
    %64 = vector.broadcast %cst_12 : f32 to vector<8x96xf32>
    %65 = tpu.concatenate %63, %64 in 1 : vector<8x32xf32>, vector<8x96xf32> -> vector<8x128xf32>
    %c0_13 = arith.constant 0 : index
    %c0_14 = arith.constant 0 : index
    %66 = vector.load %arg3[%c0_13, %c0_14] : memref<8x128xf32, #tpu.memory_space<vmem>>, vector<8x128xf32>
    tpu.vector_store %arg3[%c0_13, %c0_14], %65 {strides = array<i32>} : memref<8x128xf32, #tpu.memory_space<vmem>>, vector<8x128xf32>,
    return
  }
  func.func @transform_0(%arg0: i32) -> (i32, i32) {
    %c0_i32 = arith.constant 0 : i32
    %c0_i32_0 = arith.constant 0 : i32
    %c0_i32_1 = arith.constant 0 : i32
    return %c0_i32, %c0_i32_0 : i32, i32
  }
  func.func @transform_1(%arg0: i32) -> (i32, i32) {
    %c0_i32 = arith.constant 0 : i32
    %c0_i32_0 = arith.constant 0 : i32
    %c0_i32_1 = arith.constant 0 : i32
    return %c0_i32, %c0_i32_0 : i32, i32
  }
  func.func @transform_2(%arg0: i32) -> (i32, i32) {
    %c0_i32 = arith.constant 0 : i32
    %c0_i32_0 = arith.constant 0 : i32
    %c0_i32_1 = arith.constant 0 : i32
    return %c0_i32, %c0_i32_0 : i32, i32
  }
}

</mosaic_0001>

<llo_original>
// kernel: temporal_block.1
$region0: #{temporal_block.1}
  #allocation0 [shape = 'u32[]', space=smem, size = 0x4, offset = 0x4, fixed_abs, tag = 'smem constant byte address 0x4 - core index']
  #allocation1 [shape = 'u32[144,128]{1,0:T(1,128)}', space=vmem, size = 0x12000, scoped, tag = 'internal scratch']
  %s0 = inlined_call_operand.vmem [shape: f32[4,32], index: 0, kind: input, shape index: {}]
  %s1 = inlined_call_operand.vmem [shape: f32[8,43], index: 1, kind: input, shape index: {}]
  %s2 = inlined_call_operand.vmem [shape: f32[8,128], index: 2, kind: output, shape index: {}]
  %s3 = sld [smem:[#allocation0]]
  $region18: #{temporal_block.1} parent=0
    _
  %s5 = ssub.s32 1, %s3
  %s6 = scalar_select 0, %s5, %s3
  // Predicated region
  $region2: #{temporal_block.1} parent=0 // pred_check
    _
  $region3: #{temporal_block.1} parent=0 // pred_check_branch
    %8 = sbr.rel (0) target = $region5
  $region4: #{temporal_block.1} parent=0 // pred_region
    _
  $region5: #{temporal_block.1} parent=0 // pred_fallthru
    _
  // Predicated region
  $region6: #{temporal_block.1} parent=0 // pred_check
    _
  $region7: #{temporal_block.1} parent=0 // pred_check_branch
    %10 = sbr.rel (0) target = $region9
  $region8: #{temporal_block.1} parent=0 // pred_region
    _
  $region9: #{temporal_block.1} parent=0 // pred_fallthru
    _
  %v11 = vld [vmem:[%s0] sm:$0xf]
  %v12 = vld [vmem:[%s1] sm:$0xff]
  %14 = vrot.lane.b32.xlu0 %v11, 114
  %v15 = vpop.permute.xlu0 %14
  %17 = vrot.lane.b32.xlu0 %v11, 2
  %v18 = vpop.permute.xlu0 %17
  %vm20 = vcmask 15360
  %v21 = vsel %vm20, %v15, %v18
  %vm22 = vcmask 130048
  %v23 = vsel %vm22, %v21, %v15
  %vm24 = vcmask 146432
  %v25 = vsel %vm24, %v23, %v18
  %26 = vrot.lane.b32.xlu0 %v11, 113
  %v27 = vpop.permute.xlu0 %26
  %29 = vrot.lane.b32.xlu0 %v11, 1
  %v30 = vpop.permute.xlu0 %29
  %vm32 = vcmask 7168
  %v33 = vsel %vm32, %v27, %v30
  %v34 = vsel %vm22, %v33, %v27
  %vm35 = vcmask 138240
  %v36 = vsel %vm35, %v34, %v30
  %38 = vrot.lane.b32.xlu0 %v12, 124
  %v39 = vpop.permute.xlu0 %38
  %vm40 = vcmask 31744
  %v41 = vsel %vm40, %v39, 0
  %vm43 = vcmask 1043456
  %v45 = vsel %vm43, %v36, 0
  %47 = vmatprep.subr.mxu0 0.0
  %48 = vmatpush1.msra.mxu0 0.0
  %49 = vmatprep.subr.mxu0 0.0
  %50 = vmatpush1.msra.mxu0 0.0
  %51 = vmatprep.subr.mxu0 0.0
  %52 = vmatpush1.msra.mxu0 0.0
  %53 = vmatprep.subr.mxu0 0.0
  %54 = vmatpush1.msra.mxu0 0.0
  %55 = vmatprep.subr.mxu0 0.0
  %56 = vmatpush1.msra.mxu0 0.0
  %57 = vmatprep.subr.mxu0 0.0
  %58 = vmatpush1.msra.mxu0 0.0
  %59 = vmatprep.subr.mxu0 0.0
  %60 = vmatpush1.msra.mxu0 0.0
  %61 = vmatprep.subr.mxu0 0.0
  %62 = vmatpush1.msra.mxu0 0.0
  %63 = vmatprep.subr.mxu0 0.0
  %64 = vmatpush1.msra.mxu0 0.0
  %65 = vmatprep.subr.mxu0 0.0
  %66 = vmatpush1.msra.mxu0 0.0
  %67 = vmatprep.subr.mxu0 0.0
  %68 = vmatpush1.msra.mxu0 0.0
  %69 = vmatprep.subr.mxu0 0.0
  %70 = vmatpush1.msra.mxu0 0.0
  %71 = vmatprep.subr.mxu0 0.0
  %72 = vmatpush1.msra.mxu0 0.0
  %73 = vmatprep.subr.mxu0 0.0
  %74 = vmatpush1.msra.mxu0 0.0
  %75 = vmatprep.subr.mxu0 0.0
  %76 = vmatpush1.msra.mxu0 0.0
  %77 = vmatprep.subr.mxu0 0.0
  %78 = vmatpush1.msra.mxu0 %v45
  %79 = vmatprep.subr.mxu0 0.0
  %80 = vmatpush2.msra.mxu0 0.0
  %81 = vmatprep.subr.mxu0 0.0
  %82 = vmatpush2.msra.mxu0 0.0
  %83 = vmatprep.subr.mxu0 0.0
  %84 = vmatpush2.msra.mxu0 0.0
  %85 = vmatprep.subr.mxu0 0.0
  %86 = vmatpush2.msra.mxu0 0.0
  %87 = vmatprep.subr.mxu0 0.0
  %88 = vmatpush2.msra.mxu0 0.0
  %89 = vmatprep.subr.mxu0 0.0
  %90 = vmatpush2.msra.mxu0 0.0
  %91 = vmatprep.subr.mxu0 0.0
  %92 = vmatpush2.msra.mxu0 0.0
  %93 = vmatprep.subr.mxu0 0.0
  %94 = vmatpush2.msra.mxu0 0.0
  %95 = vmatprep.subr.mxu0 0.0
  %96 = vmatpush2.msra.mxu0 0.0
  %97 = vmatprep.subr.mxu0 0.0
  %98 = vmatpush2.msra.mxu0 0.0
  %99 = vmatprep.subr.mxu0 0.0
  %100 = vmatpush2.msra.mxu0 0.0
  %101 = vmatprep.subr.mxu0 0.0
  %102 = vmatpush2.msra.mxu0 0.0
  %103 = vmatprep.subr.mxu0 0.0
  %104 = vmatpush2.msra.mxu0 0.0
  %105 = vmatprep.subr.mxu0 0.0
  %106 = vmatpush2.msra.mxu0 0.0
  %107 = vmatprep.subr.mxu0 0.0
  %108 = vmatpush2.msra.mxu0 0.0
  %109 = vmatprep.subr.mxu0 0.0
  %110 = vmatpush2.msra.mxu0 0.0
  %111 = vmatprep.mubr.f32.mxu0 0.0
  %112 = vmatmul.mubr.f32.gmra.mxu0 %v41
  %v113 = vpop.f32.mrf.mxu0
  %v114 = vadd.f32 0.0, %v113
  %v115 = vpop.f32.mrf.mxu0
  %116 = vdwg.mxu0
  %v117 = vsel %vm40, %v12, 0
  %v120 = vsel %vm43, %v25, 0
  %122 = vmatprep.subr.mxu0 0.0
  %123 = vmatpush1.msra.mxu0 0.0
  %124 = vmatprep.subr.mxu0 0.0
  %125 = vmatpush1.msra.mxu0 0.0
  %126 = vmatprep.subr.mxu0 0.0
  %127 = vmatpush1.msra.mxu0 0.0
  %128 = vmatprep.subr.mxu0 0.0
  %129 = vmatpush1.msra.mxu0 0.0
  %130 = vmatprep.subr.mxu0 0.0
  %131 = vmatpush1.msra.mxu0 0.0
  %132 = vmatprep.subr.mxu0 0.0
  %133 = vmatpush1.msra.mxu0 0.0
  %134 = vmatprep.subr.mxu0 0.0
  %135 = vmatpush1.msra.mxu0 0.0
  %136 = vmatprep.subr.mxu0 0.0
  %137 = vmatpush1.msra.mxu0 0.0
  %138 = vmatprep.subr.mxu0 0.0
  %139 = vmatpush1.msra.mxu0 0.0
  %140 = vmatprep.subr.mxu0 0.0
  %141 = vmatpush1.msra.mxu0 0.0
  %142 = vmatprep.subr.mxu0 0.0
  %143 = vmatpush1.msra.mxu0 0.0
  %144 = vmatprep.subr.mxu0 0.0
  %145 = vmatpush1.msra.mxu0 0.0
  %146 = vmatprep.subr.mxu0 0.0
  %147 = vmatpush1.msra.mxu0 0.0
  %148 = vmatprep.subr.mxu0 0.0
  %149 = vmatpush1.msra.mxu0 0.0
  %150 = vmatprep.subr.mxu0 0.0
  %151 = vmatpush1.msra.mxu0 0.0
  %152 = vmatprep.subr.mxu0 0.0
  %153 = vmatpush1.msra.mxu0 %v120
  %154 = vmatprep.subr.mxu0 0.0
  %155 = vmatpush2.msra.mxu0 0.0
  %156 = vmatprep.subr.mxu0 0.0
  %157 = vmatpush2.msra.mxu0 0.0
  %158 = vmatprep.subr.mxu0 0.0
  %159 = vmatpush2.msra.mxu0 0.0
  %160 = vmatprep.subr.mxu0 0.0
  %161 = vmatpush2.msra.mxu0 0.0
  %162 = vmatprep.subr.mxu0 0.0
  %163 = vmatpush2.msra.mxu0 0.0
  %164 = vmatprep.subr.mxu0 0.0
  %165 = vmatpush2.msra.mxu0 0.0
  %166 = vmatprep.subr.mxu0 0.0
  %167 = vmatpush2.msra.mxu0 0.0
  %168 = vmatprep.subr.mxu0 0.0
  %169 = vmatpush2.msra.mxu0 0.0
  %170 = vmatprep.subr.mxu0 0.0
  %171 = vmatpush2.msra.mxu0 0.0
  %172 = vmatprep.subr.mxu0 0.0
  %173 = vmatpush2.msra.mxu0 0.0
  %174 = vmatprep.subr.mxu0 0.0
  %175 = vmatpush2.msra.mxu0 0.0
  %176 = vmatprep.subr.mxu0 0.0
  %177 = vmatpush2.msra.mxu0 0.0
  %178 = vmatprep.subr.mxu0 0.0
  %179 = vmatpush2.msra.mxu0 0.0
  %180 = vmatprep.subr.mxu0 0.0
  %181 = vmatpush2.msra.mxu0 0.0
  %182 = vmatprep.subr.mxu0 0.0
  %183 = vmatpush2.msra.mxu0 0.0
  %184 = vmatprep.subr.mxu0 0.0
  %185 = vmatpush2.msra.mxu0 0.0
  %186 = vmatprep.mubr.f32.mxu0 0.0
  %187 = vmatmul.mubr.f32.gmra.mxu0 %v117
  %v188 = vpop.f32.mrf.mxu0
  %v189 = vadd.f32 %v114, %v188
  %v190 = vpop.f32.mrf.mxu0
  %191 = vdwg.mxu0
  %192 = vrot.lane.b32.xlu0 %v12, 120
  %v193 = vpop.permute.xlu0 %192
  %v194 = vsel %vm40, %v193, 0
  %v196 = vsel %vm43, %v11, 0
  %198 = vmatprep.subr.mxu0 0.0
  %199 = vmatpush1.msra.mxu0 0.0
  %200 = vmatprep.subr.mxu0 0.0
  %201 = vmatpush1.msra.mxu0 0.0
  %202 = vmatprep.subr.mxu0 0.0
  %203 = vmatpush1.msra.mxu0 0.0
  %204 = vmatprep.subr.mxu0 0.0
  %205 = vmatpush1.msra.mxu0 0.0
  %206 = vmatprep.subr.mxu0 0.0
  %207 = vmatpush1.msra.mxu0 0.0
  %208 = vmatprep.subr.mxu0 0.0
  %209 = vmatpush1.msra.mxu0 0.0
  %210 = vmatprep.subr.mxu0 0.0
  %211 = vmatpush1.msra.mxu0 0.0
  %212 = vmatprep.subr.mxu0 0.0
  %213 = vmatpush1.msra.mxu0 0.0
  %214 = vmatprep.subr.mxu0 0.0
  %215 = vmatpush1.msra.mxu0 0.0
  %216 = vmatprep.subr.mxu0 0.0
  %217 = vmatpush1.msra.mxu0 0.0
  %218 = vmatprep.subr.mxu0 0.0
  %219 = vmatpush1.msra.mxu0 0.0
  %220 = vmatprep.subr.mxu0 0.0
  %221 = vmatpush1.msra.mxu0 0.0
  %222 = vmatprep.subr.mxu0 0.0
  %223 = vmatpush1.msra.mxu0 0.0
  %224 = vmatprep.subr.mxu0 0.0
  %225 = vmatpush1.msra.mxu0 0.0
  %226 = vmatprep.subr.mxu0 0.0
  %227 = vmatpush1.msra.mxu0 0.0
  %228 = vmatprep.subr.mxu0 0.0
  %229 = vmatpush1.msra.mxu0 %v196
  %230 = vmatprep.subr.mxu0 0.0
  %231 = vmatpush2.msra.mxu0 0.0
  %232 = vmatprep.subr.mxu0 0.0
  %233 = vmatpush2.msra.mxu0 0.0
  %234 = vmatprep.subr.mxu0 0.0
  %235 = vmatpush2.msra.mxu0 0.0
  %236 = vmatprep.subr.mxu0 0.0
  %237 = vmatpush2.msra.mxu0 0.0
  %238 = vmatprep.subr.mxu0 0.0
  %239 = vmatpush2.msra.mxu0 0.0
  %240 = vmatprep.subr.mxu0 0.0
  %241 = vmatpush2.msra.mxu0 0.0
  %242 = vmatprep.subr.mxu0 0.0
  %243 = vmatpush2.msra.mxu0 0.0
  %244 = vmatprep.subr.mxu0 0.0
  %245 = vmatpush2.msra.mxu0 0.0
  %246 = vmatprep.subr.mxu0 0.0
  %247 = vmatpush2.msra.mxu0 0.0
  %248 = vmatprep.subr.mxu0 0.0
  %249 = vmatpush2.msra.mxu0 0.0
  %250 = vmatprep.subr.mxu0 0.0
  %251 = vmatpush2.msra.mxu0 0.0
  %252 = vmatprep.subr.mxu0 0.0
  %253 = vmatpush2.msra.mxu0 0.0
  %254 = vmatprep.subr.mxu0 0.0
  %255 = vmatpush2.msra.mxu0 0.0
  %256 = vmatprep.subr.mxu0 0.0
  %257 = vmatpush2.msra.mxu0 0.0
  %258 = vmatprep.subr.mxu0 0.0
  %259 = vmatpush2.msra.mxu0 0.0
  %260 = vmatprep.subr.mxu0 0.0
  %261 = vmatpush2.msra.mxu0 0.0
  %262 = vmatprep.mubr.f32.mxu0 0.0
  %263 = vmatmul.mubr.f32.gmra.mxu0 %v194
  %v264 = vpop.f32.mrf.mxu0
  %v265 = vadd.f32 0.0, %v264
  %v266 = vpop.f32.mrf.mxu0
  %267 = vdwg.mxu0
  %v268 = vadd.f32 %v189, %v265
  %269 = vset.pattern.permute.xlu0 40
  %270 = vperm.xlu0 %269, %v12
  %v271 = vpop.permute.xlu0 %270
  %v273 = vadd.f32 %v268, %v271
  %v274 = vmax.f32 %v273, 0.0
  %276 = vrot.lane.b32.xlu0 %v274, 127
  %v277 = vpop.permute.xlu0 %276
  %279 = vrot.lane.b32.xlu0 %v274, 15
  %v280 = vpop.permute.xlu0 %279
  %vm282 = vcmask 121856
  %v283 = vsel %vm282, %v277, %v280
  %v284 = vsel %vm22, %v283, %v277
  %vm285 = vcmask 252928
  %v286 = vsel %vm285, %v284, %v280
  %287 = vrot.lane.b32.xlu0 %v12, 108
  %v288 = vpop.permute.xlu0 %287
  %vm289 = vcmask 64512
  %v290 = vsel %vm289, %v288, 0
  %292 = vmatprep.subr.mxu0 0.0
  %293 = vmatpush1.msra.mxu0 0.0
  %294 = vmatprep.subr.mxu0 0.0
  %295 = vmatpush1.msra.mxu0 0.0
  %296 = vmatprep.subr.mxu0 0.0
  %297 = vmatpush1.msra.mxu0 0.0
  %298 = vmatprep.subr.mxu0 0.0
  %299 = vmatpush1.msra.mxu0 0.0
  %300 = vmatprep.subr.mxu0 0.0
  %301 = vmatpush1.msra.mxu0 0.0
  %302 = vmatprep.subr.mxu0 0.0
  %303 = vmatpush1.msra.mxu0 0.0
  %304 = vmatprep.subr.mxu0 0.0
  %305 = vmatpush1.msra.mxu0 0.0
  %306 = vmatprep.subr.mxu0 0.0
  %307 = vmatpush1.msra.mxu0 0.0
  %308 = vmatprep.subr.mxu0 0.0
  %309 = vmatpush1.msra.mxu0 0.0
  %310 = vmatprep.subr.mxu0 0.0
  %311 = vmatpush1.msra.mxu0 0.0
  %312 = vmatprep.subr.mxu0 0.0
  %313 = vmatpush1.msra.mxu0 0.0
  %314 = vmatprep.subr.mxu0 0.0
  %315 = vmatpush1.msra.mxu0 0.0
  %316 = vmatprep.subr.mxu0 0.0
  %317 = vmatpush1.msra.mxu0 0.0
  %318 = vmatprep.subr.mxu0 0.0
  %319 = vmatpush1.msra.mxu0 0.0
  %320 = vmatprep.subr.mxu0 0.0
  %321 = vmatpush1.msra.mxu0 0.0
  %322 = vmatprep.subr.mxu0 0.0
  %323 = vmatpush1.msra.mxu0 %v286
  %324 = vmatprep.subr.mxu0 0.0
  %325 = vmatpush2.msra.mxu0 0.0
  %326 = vmatprep.subr.mxu0 0.0
  %327 = vmatpush2.msra.mxu0 0.0
  %328 = vmatprep.subr.mxu0 0.0
  %329 = vmatpush2.msra.mxu0 0.0
  %330 = vmatprep.subr.mxu0 0.0
  %331 = vmatpush2.msra.mxu0 0.0
  %332 = vmatprep.subr.mxu0 0.0
  %333 = vmatpush2.msra.mxu0 0.0
  %334 = vmatprep.subr.mxu0 0.0
  %335 = vmatpush2.msra.mxu0 0.0
  %336 = vmatprep.subr.mxu0 0.0
  %337 = vmatpush2.msra.mxu0 0.0
  %338 = vmatprep.subr.mxu0 0.0
  %339 = vmatpush2.msra.mxu0 0.0
  %340 = vmatprep.subr.mxu0 0.0
  %341 = vmatpush2.msra.mxu0 0.0
  %342 = vmatprep.subr.mxu0 0.0
  %343 = vmatpush2.msra.mxu0 0.0
  %344 = vmatprep.subr.mxu0 0.0
  %345 = vmatpush2.msra.mxu0 0.0
  %346 = vmatprep.subr.mxu0 0.0
  %347 = vmatpush2.msra.mxu0 0.0
  %348 = vmatprep.subr.mxu0 0.0
  %349 = vmatpush2.msra.mxu0 0.0
  %350 = vmatprep.subr.mxu0 0.0
  %351 = vmatpush2.msra.mxu0 0.0
  %352 = vmatprep.subr.mxu0 0.0
  %353 = vmatpush2.msra.mxu0 0.0
  %354 = vmatprep.subr.mxu0 0.0
  %355 = vmatpush2.msra.mxu0 0.0
  %356 = vmatprep.mubr.f32.mxu0 0.0
  %357 = vmatmul.mubr.f32.gmra.mxu0 %v290
  %v358 = vpop.f32.mrf.mxu0
  %v359 = vadd.f32 0.0, %v358
  %v360 = vpop.f32.mrf.mxu0
  %361 = vdwg.mxu0
  %362 = vrot.lane.b32.xlu0 %v12, 116
  %v363 = vpop.permute.xlu0 %362
  %v364 = vsel %vm289, %v363, 0
  %366 = vmatprep.subr.mxu0 0.0
  %367 = vmatpush1.msra.mxu0 0.0
  %368 = vmatprep.subr.mxu0 0.0
  %369 = vmatpush1.msra.mxu0 0.0
  %370 = vmatprep.subr.mxu0 0.0
  %371 = vmatpush1.msra.mxu0 0.0
  %372 = vmatprep.subr.mxu0 0.0
  %373 = vmatpush1.msra.mxu0 0.0
  %374 = vmatprep.subr.mxu0 0.0
  %375 = vmatpush1.msra.mxu0 0.0
  %376 = vmatprep.subr.mxu0 0.0
  %377 = vmatpush1.msra.mxu0 0.0
  %378 = vmatprep.subr.mxu0 0.0
  %379 = vmatpush1.msra.mxu0 0.0
  %380 = vmatprep.subr.mxu0 0.0
  %381 = vmatpush1.msra.mxu0 0.0
  %382 = vmatprep.subr.mxu0 0.0
  %383 = vmatpush1.msra.mxu0 0.0
  %384 = vmatprep.subr.mxu0 0.0
  %385 = vmatpush1.msra.mxu0 0.0
  %386 = vmatprep.subr.mxu0 0.0
  %387 = vmatpush1.msra.mxu0 0.0
  %388 = vmatprep.subr.mxu0 0.0
  %389 = vmatpush1.msra.mxu0 0.0
  %390 = vmatprep.subr.mxu0 0.0
  %391 = vmatpush1.msra.mxu0 0.0
  %392 = vmatprep.subr.mxu0 0.0
  %393 = vmatpush1.msra.mxu0 0.0
  %394 = vmatprep.subr.mxu0 0.0
  %395 = vmatpush1.msra.mxu0 0.0
  %396 = vmatprep.subr.mxu0 0.0
  %397 = vmatpush1.msra.mxu0 %v274
  %398 = vmatprep.subr.mxu0 0.0
  %399 = vmatpush2.msra.mxu0 0.0
  %400 = vmatprep.subr.mxu0 0.0
  %401 = vmatpush2.msra.mxu0 0.0
  %402 = vmatprep.subr.mxu0 0.0
  %403 = vmatpush2.msra.mxu0 0.0
  %404 = vmatprep.subr.mxu0 0.0
  %405 = vmatpush2.msra.mxu0 0.0
  %406 = vmatprep.subr.mxu0 0.0
  %407 = vmatpush2.msra.mxu0 0.0
  %408 = vmatprep.subr.mxu0 0.0
  %409 = vmatpush2.msra.mxu0 0.0
  %410 = vmatprep.subr.mxu0 0.0
  %411 = vmatpush2.msra.mxu0 0.0
  %412 = vmatprep.subr.mxu0 0.0
  %413 = vmatpush2.msra.mxu0 0.0
  %414 = vmatprep.subr.mxu0 0.0
  %415 = vmatpush2.msra.mxu0 0.0
  %416 = vmatprep.subr.mxu0 0.0
  %417 = vmatpush2.msra.mxu0 0.0
  %418 = vmatprep.subr.mxu0 0.0
  %419 = vmatpush2.msra.mxu0 0.0
  %420 = vmatprep.subr.mxu0 0.0
  %421 = vmatpush2.msra.mxu0 0.0
  %422 = vmatprep.subr.mxu0 0.0
  %423 = vmatpush2.msra.mxu0 0.0
  %424 = vmatprep.subr.mxu0 0.0
  %425 = vmatpush2.msra.mxu0 0.0
  %426 = vmatprep.subr.mxu0 0.0
  %427 = vmatpush2.msra.mxu0 0.0
  %428 = vmatprep.subr.mxu0 0.0
  %429 = vmatpush2.msra.mxu0 0.0
  %430 = vmatprep.mubr.f32.mxu0 0.0
  %431 = vmatmul.mubr.f32.gmra.mxu0 %v364
  %v432 = vpop.f32.mrf.mxu0
  %v433 = vadd.f32 %v359, %v432
  %v434 = vpop.f32.mrf.mxu0
  %435 = vdwg.mxu0
  %436 = vrot.lane.b32.xlu0 %v274, 126
  %v437 = vpop.permute.xlu0 %436
  %439 = vrot.lane.b32.xlu0 %v274, 14
  %v440 = vpop.permute.xlu0 %439
  %vm442 = vcmask 113664
  %v443 = vsel %vm442, %v437, %v440
  %v444 = vsel %vm22, %v443, %v437
  %vm445 = vcmask 244736
  %v446 = vsel %vm445, %v444, %v440
  %447 = vrot.lane.b32.xlu0 %v12, 100
  %v448 = vpop.permute.xlu0 %447
  %v449 = vsel %vm289, %v448, 0
  %451 = vmatprep.subr.mxu0 0.0
  %452 = vmatpush1.msra.mxu0 0.0
  %453 = vmatprep.subr.mxu0 0.0
  %454 = vmatpush1.msra.mxu0 0.0
  %455 = vmatprep.subr.mxu0 0.0
  %456 = vmatpush1.msra.mxu0 0.0
  %457 = vmatprep.subr.mxu0 0.0
  %458 = vmatpush1.msra.mxu0 0.0
  %459 = vmatprep.subr.mxu0 0.0
  %460 = vmatpush1.msra.mxu0 0.0
  %461 = vmatprep.subr.mxu0 0.0
  %462 = vmatpush1.msra.mxu0 0.0
  %463 = vmatprep.subr.mxu0 0.0
  %464 = vmatpush1.msra.mxu0 0.0
  %465 = vmatprep.subr.mxu0 0.0
  %466 = vmatpush1.msra.mxu0 0.0
  %467 = vmatprep.subr.mxu0 0.0
  %468 = vmatpush1.msra.mxu0 0.0
  %469 = vmatprep.subr.mxu0 0.0
  %470 = vmatpush1.msra.mxu0 0.0
  %471 = vmatprep.subr.mxu0 0.0
  %472 = vmatpush1.msra.mxu0 0.0
  %473 = vmatprep.subr.mxu0 0.0
  %474 = vmatpush1.msra.mxu0 0.0
  %475 = vmatprep.subr.mxu0 0.0
  %476 = vmatpush1.msra.mxu0 0.0
  %477 = vmatprep.subr.mxu0 0.0
  %478 = vmatpush1.msra.mxu0 0.0
  %479 = vmatprep.subr.mxu0 0.0
  %480 = vmatpush1.msra.mxu0 0.0
  %481 = vmatprep.subr.mxu0 0.0
  %482 = vmatpush1.msra.mxu0 %v446
  %483 = vmatprep.subr.mxu0 0.0
  %484 = vmatpush2.msra.mxu0 0.0
  %485 = vmatprep.subr.mxu0 0.0
  %486 = vmatpush2.msra.mxu0 0.0
  %487 = vmatprep.subr.mxu0 0.0
  %488 = vmatpush2.msra.mxu0 0.0
  %489 = vmatprep.subr.mxu0 0.0
  %490 = vmatpush2.msra.mxu0 0.0
  %491 = vmatprep.subr.mxu0 0.0
  %492 = vmatpush2.msra.mxu0 0.0
  %493 = vmatprep.subr.mxu0 0.0
  %494 = vmatpush2.msra.mxu0 0.0
  %495 = vmatprep.subr.mxu0 0.0
  %496 = vmatpush2.msra.mxu0 0.0
  %497 = vmatprep.subr.mxu0 0.0
  %498 = vmatpush2.msra.mxu0 0.0
  %499 = vmatprep.subr.mxu0 0.0
  %500 = vmatpush2.msra.mxu0 0.0
  %501 = vmatprep.subr.mxu0 0.0
  %502 = vmatpush2.msra.mxu0 0.0
  %503 = vmatprep.subr.mxu0 0.0
  %504 = vmatpush2.msra.mxu0 0.0
  %505 = vmatprep.subr.mxu0 0.0
  %506 = vmatpush2.msra.mxu0 0.0
  %507 = vmatprep.subr.mxu0 0.0
  %508 = vmatpush2.msra.mxu0 0.0
  %509 = vmatprep.subr.mxu0 0.0
  %510 = vmatpush2.msra.mxu0 0.0
  %511 = vmatprep.subr.mxu0 0.0
  %512 = vmatpush2.msra.mxu0 0.0
  %513 = vmatprep.subr.mxu0 0.0
  %514 = vmatpush2.msra.mxu0 0.0
  %515 = vmatprep.mubr.f32.mxu0 0.0
  %516 = vmatmul.mubr.f32.gmra.mxu0 %v449
  %v517 = vpop.f32.mrf.mxu0
  %v518 = vadd.f32 0.0, %v517
  %v519 = vpop.f32.mrf.mxu0
  %520 = vdwg.mxu0
  %v521 = vadd.f32 %v433, %v518
  %522 = vset.pattern.permute.xlu0 41
  %523 = vperm.xlu0 %522, %v12
  %v524 = vpop.permute.xlu0 %523
  %v526 = vadd.f32 %v521, %v524
  %v527 = vmax.f32 %v526, 0.0
  %528 = vset.pattern.permute.xlu0 42
  %529 = vperm.xlu0 %528, %v12
  %v530 = vpop.permute.xlu0 %529
  %532 = vrot.lane.b32.xlu0 %v12, 92
  %v533 = vpop.permute.xlu0 %532
  %v534 = vsel %vm40, %v533, 0
  %536 = vmatprep.subr.mxu0 0.0
  %537 = vmatpush1.msra.mxu0 0.0
  %538 = vmatprep.subr.mxu0 0.0
  %539 = vmatpush1.msra.mxu0 0.0
  %540 = vmatprep.subr.mxu0 0.0
  %541 = vmatpush1.msra.mxu0 0.0
  %542 = vmatprep.subr.mxu0 0.0
  %543 = vmatpush1.msra.mxu0 0.0
  %544 = vmatprep.subr.mxu0 0.0
  %545 = vmatpush1.msra.mxu0 0.0
  %546 = vmatprep.subr.mxu0 0.0
  %547 = vmatpush1.msra.mxu0 0.0
  %548 = vmatprep.subr.mxu0 0.0
  %549 = vmatpush1.msra.mxu0 0.0
  %550 = vmatprep.subr.mxu0 0.0
  %551 = vmatpush1.msra.mxu0 0.0
  %552 = vmatprep.subr.mxu0 0.0
  %553 = vmatpush1.msra.mxu0 0.0
  %554 = vmatprep.subr.mxu0 0.0
  %555 = vmatpush1.msra.mxu0 0.0
  %556 = vmatprep.subr.mxu0 0.0
  %557 = vmatpush1.msra.mxu0 0.0
  %558 = vmatprep.subr.mxu0 0.0
  %559 = vmatpush1.msra.mxu0 0.0
  %560 = vmatprep.subr.mxu0 0.0
  %561 = vmatpush1.msra.mxu0 0.0
  %562 = vmatprep.subr.mxu0 0.0
  %563 = vmatpush1.msra.mxu0 0.0
  %564 = vmatprep.subr.mxu0 0.0
  %565 = vmatpush1.msra.mxu0 0.0
  %566 = vmatprep.subr.mxu0 0.0
  %567 = vmatpush1.msra.mxu0 %v196
  %568 = vmatprep.subr.mxu0 0.0
  %569 = vmatpush2.msra.mxu0 0.0
  %570 = vmatprep.subr.mxu0 0.0
  %571 = vmatpush2.msra.mxu0 0.0
  %572 = vmatprep.subr.mxu0 0.0
  %573 = vmatpush2.msra.mxu0 0.0
  %574 = vmatprep.subr.mxu0 0.0
  %575 = vmatpush2.msra.mxu0 0.0
  %576 = vmatprep.subr.mxu0 0.0
  %577 = vmatpush2.msra.mxu0 0.0
  %578 = vmatprep.subr.mxu0 0.0
  %579 = vmatpush2.msra.mxu0 0.0
  %580 = vmatprep.subr.mxu0 0.0
  %581 = vmatpush2.msra.mxu0 0.0
  %582 = vmatprep.subr.mxu0 0.0
  %583 = vmatpush2.msra.mxu0 0.0
  %584 = vmatprep.subr.mxu0 0.0
  %585 = vmatpush2.msra.mxu0 0.0
  %586 = vmatprep.subr.mxu0 0.0
  %587 = vmatpush2.msra.mxu0 0.0
  %588 = vmatprep.subr.mxu0 0.0
  %589 = vmatpush2.msra.mxu0 0.0
  %590 = vmatprep.subr.mxu0 0.0
  %591 = vmatpush2.msra.mxu0 0.0
  %592 = vmatprep.subr.mxu0 0.0
  %593 = vmatpush2.msra.mxu0 0.0
  %594 = vmatprep.subr.mxu0 0.0
  %595 = vmatpush2.msra.mxu0 0.0
  %596 = vmatprep.subr.mxu0 0.0
  %597 = vmatpush2.msra.mxu0 0.0
  %598 = vmatprep.subr.mxu0 0.0
  %599 = vmatpush2.msra.mxu0 0.0
  %600 = vmatprep.mubr.f32.mxu0 0.0
  %601 = vmatmul.mubr.f32.gmra.mxu0 %v534
  %v602 = vpop.f32.mrf.mxu0
  %v603 = vadd.f32 %v530, %v602
  %v604 = vpop.f32.mrf.mxu0
  %605 = vdwg.mxu0
  %v606 = vadd.f32 %v527, %v603
  %v607 = vmax.f32 %v606, 0.0
  %vm608 = vcmask 261120
  %v609 = vsel %vm608, %v607, 0.0
  %610 = vst [vmem:[%s2] sm:$0xff] %v609
  // Predicated region
  $region10: #{temporal_block.1} parent=0 // pred_check
    _
  $region11: #{temporal_block.1} parent=0 // pred_check_branch
    %612 = sbr.rel (0) target = $region13
  $region12: #{temporal_block.1} parent=0 // pred_region
    _
  $region13: #{temporal_block.1} parent=0 // pred_fallthru
    _
  // Predicated region
  $region14: #{temporal_block.1} parent=0 // pred_check
    _
  $region15: #{temporal_block.1} parent=0 // pred_check_branch
    %614 = sbr.rel (0) target = $region17
  $region16: #{temporal_block.1} parent=0 // pred_region
    _
  $region17: #{temporal_block.1} parent=0 // pred_fallthru
    _

</llo_original>
